<compile_context>
chip_gen: v5e
topology: v5e:2x2
jax: 0.10.0
libtpu: 0.0.40
codegen_flags: <defaults>
</compile_context>

<pallas_src>
import functools

import jax
import jax.numpy as jnp
from jax.experimental import pallas as pl
from jax.experimental.pallas import tpu as pltpu

ALPHA = 0.95


def _round_up(v, m):
    return (v + m - 1) // m * m


def _kd_kernel(x_ref, t_ref, lab_ref, o_ref, *, n_rows, n_cols, mask_rows):
    i = pl.program_id(0)

    x = x_ref[...].astype(jnp.float32)        # (tn, cp) student logits
    t = t_ref[...].astype(jnp.float32)        # (tn, cp) teacher logits
    labels = lab_ref[...]                     # (tn, 1) int32 hard labels

    tn, cp = x.shape
    lane = jax.lax.broadcasted_iota(jnp.int32, (1, cp), 1)

    # Lanes past the true class count (static decision).  Sentinel must be a large-negative
    # FINITE value: exp() flushes it to exactly 0 while (t_sh - x_sh) stays finite.
    if n_cols != cp:
        lane_valid = lane < n_cols            # (1, cp), broadcasts over rows
        neg = jnp.float32(-1e30)
        x = jnp.where(lane_valid, x, neg)
        t = jnp.where(lane_valid, t, neg)

    # Shifted logits + per-row log partitions (no full-matrix log-softmax temporaries).
    x_sh = x - jnp.max(x, axis=1, keepdims=True)
    t_sh = t - jnp.max(t, axis=1, keepdims=True)
    e_t = jnp.exp(t_sh)
    z_x = jnp.sum(jnp.exp(x_sh), axis=1, keepdims=True)      # (tn, 1)
    z_t = jnp.sum(e_t, axis=1, keepdims=True)                # (tn, 1)
    log_zx = jnp.log(z_x)
    log_zt = jnp.log(z_t)

    # KL per row: sum_j p_t*(log p_t - log p_x) = S / z_t + (log z_x - log z_t),
    # with S = sum_j e_t*(t_sh - x_sh).  Masked lanes contribute exactly 0 (e_t == 0).
    s_row = jnp.sum(e_t * (t_sh - x_sh), axis=1, keepdims=True)
    kl_row = s_row / z_t + (log_zx - log_zt)

    # Cross-entropy (NLL) per row: log z_x - x_sh[label].
    label_hit = lane == labels                                # (tn, cp) via broadcast
    x_pick = jnp.sum(jnp.where(label_hit, x_sh, 0.0), axis=1, keepdims=True)
    ce_row = log_zx - x_pick

    if mask_rows:
        # Rows past the true batch size (edge tile): garbage may be NaN/Inf, but it stays
        # confined to its own row and is removed here with a select (never arithmetic).
        row = jax.lax.broadcasted_iota(jnp.int32, (tn, 1), 0) + i * tn
        row_valid = row < n_rows
        kl_row = jnp.where(row_valid, kl_row, 0.0)
        ce_row = jnp.where(row_valid, ce_row, 0.0)

    kl_tile = jnp.sum(kl_row)
    ce_tile = jnp.sum(ce_row)

    # One lane-dense (1, 8, 128) partial block per tile: lane 0 = KL sum, lane 1 = NLL sum.
    lane_o = jax.lax.broadcasted_iota(jnp.int32, o_ref.shape, 2)
    o_ref[...] = jnp.where(lane_o == 0, kl_tile,
                           jnp.where(lane_o == 1, ce_tile, 0.0))


def soft_cross_entropy(inputs, target, true_labels, *, block_rows=None):
    """inputs, target: [N, C] float logits (any float dtype); true_labels: [N] int class ids."""
    n, c = inputs.shape
    cp = _round_up(max(c, 128), 128)                 # lane-dense class axis (masked in-kernel)
    itemsize = inputs.dtype.itemsize
    sub = 8 * max(1, 4 // itemsize)                  # sublane packing: 8 rows f32, 16 rows bf16

    # Generation-aware VMEM budgets (v7x: 64 MiB/TC, v5e/v6e: 128 MiB).
    try:
        vmem_cap = int(getattr(pltpu.get_tpu_info(), "vmem_capacity_bytes", 0)) or 64 * 2**20
    except Exception:
        vmem_cap = 64 * 2**20
    if vmem_cap >= 96 * 2**20:                       # v5e / v6e
        ws_budget, vmem_limit = 80 * 2**20, 100 * 2**20
    else:                                            # v7x (or unknown -> conservative)
        ws_budget, vmem_limit = 36 * 2**20, 48 * 2**20

    if block_rows is None:
        # Byte-based tile sizing: ~3 MiB per input block per pipeline buffer, capped so the
        # working set (2 inputs x 2 buffers in native dtype + ~6 f32 temporaries) fits VMEM.
        per_row_in = cp * itemsize
        per_row_ws = cp * (4 * itemsize + 6 * 4)
        block_rows = min((3 * 2**20) // per_row_in, ws_budget // per_row_ws)
    tn = max(sub, (min(block_rows, _round_up(n, sub)) // sub) * sub)
    # TODO(synk): for class counts where even a (sub, cp) block exceeds the VMEM budget, a
    # C-tiled online (running-max / LSE) softmax formulation would be needed; not implemented.

    tiles = pl.cdiv(n, tn)
    labels2d = true_labels.astype(jnp.int32).reshape(n, 1)

    kernel = functools.partial(
        _kd_kernel, n_rows=n, n_cols=c, mask_rows=(tiles * tn != n))

    # No wrapper-side padding of the big logit arrays: edge blocks are clipped by the Pallas
    # DMA and invalid lanes/rows are handled in-kernel with selects.
    partials = pl.pallas_call(
        kernel,
        out_shape=jax.ShapeDtypeStruct((tiles, 8, 128), jnp.float32),
        grid=(tiles,),
        in_specs=[
            pl.BlockSpec((tn, cp), lambda i: (i, 0)),
            pl.BlockSpec((tn, cp), lambda i: (i, 0)),
            pl.BlockSpec((tn, 1), lambda i: (i, 0)),
        ],
        out_specs=pl.BlockSpec((1, 8, 128), lambda i: (i, 0, 0)),
        compiler_params=pltpu.CompilerParams(
            dimension_semantics=("parallel",),       # independent row tiles -> megacore on v7x
            vmem_limit_bytes=vmem_limit,
        ),
    )(inputs, target, labels2d)

    kl = jnp.sum(partials[:, 0, 0])
    ce = jnp.sum(partials[:, 0, 1])
    return ALPHA * kl + (1.0 - ALPHA) * ce / jnp.float32(n)


def _reference(inputs, target, true_labels):
    x = inputs.astype(jnp.float32)
    t = target.astype(jnp.float32)
    logp_x = jax.nn.log_softmax(x, axis=1)
    p_t = jax.nn.softmax(t, axis=1)
    kl = jnp.sum(p_t * (jax.nn.log_softmax(t, axis=1) - logp_x))
    ce = jnp.mean(-logp_x[jnp.arange(x.shape[0]), true_labels])
    return ALPHA * kl + (1.0 - ALPHA) * ce


if __name__ == "__main__":
    key = jax.random.PRNGKey(0)
    k1, k2, k3 = jax.random.split(key, 3)

    # Case 1: tiny single-tile problem (C < 128 exercises lane masking).
    N, C = 8, 16
    inputs = jax.random.normal(k1, (N, C), dtype=jnp.float32)
    target = jax.random.normal(k2, (N, C), dtype=jnp.float32)
    labels = jax.random.randint(k3, (N,), 0, C, dtype=jnp.int32)
    loss = soft_cross_entropy(inputs, target, labels)
    jax.block_until_ready(loss)
    ref = _reference(inputs, target, labels)
    assert jnp.allclose(loss, ref, rtol=5e-3, atol=5e-3), (loss, ref)

    # Case 2: multi-tile grid with ragged rows AND non-128-multiple classes (no wrapper pad).
    k4, k5, k6 = jax.random.split(k3, 3)
    N2, C2 = 37, 200
    inputs2 = jax.random.normal(k4, (N2, C2), dtype=jnp.float32)
    target2 = jax.random.normal(k5, (N2, C2), dtype=jnp.float32)
    labels2 = jax.random.randint(k6, (N2,), 0, C2, dtype=jnp.int32)
    loss2 = soft_cross_entropy(inputs2, target2, labels2, block_rows=16)
    jax.block_until_ready(loss2)
    ref2 = _reference(inputs2, target2, labels2)
    assert jnp.allclose(loss2, ref2, rtol=5e-3, atol=5e-3), (loss2, ref2)

    # Case 3: bf16 logits stay bf16 through the HBM->VMEM DMA (f32 compute in-kernel),
    # with a partially-filled edge block on the row axis.
    k7, k8, k9 = jax.random.split(k6, 3)
    N3, C3 = 24, 128
    inputs3 = jax.random.normal(k7, (N3, C3), dtype=jnp.bfloat16)
    target3 = jax.random.normal(k8, (N3, C3), dtype=jnp.bfloat16)
    labels3 = jax.random.randint(k9, (N3,), 0, C3, dtype=jnp.int32)
    loss3 = soft_cross_entropy(inputs3, target3, labels3)
    jax.block_until_ready(loss3)
    ref3 = _reference(inputs3, target3, labels3)
    assert jnp.allclose(loss3, ref3, rtol=1e-2, atol=1e-2), (loss3, ref3)

    print("KERNEL_OK")
</pallas_src>

<mosaic_0001>
module attributes {stable_mosaic.version = 11 : i64} {
  func.func @_kd_kernel(%arg0: i32, %arg1: memref<8x128xf32, #tpu.memory_space<vmem>>, %arg2: memref<8x128xf32, #tpu.memory_space<vmem>>, %arg3: memref<8x1xi32, #tpu.memory_space<vmem>>, %arg4: memref<1x8x128xf32, #tpu.memory_space<vmem>>) attributes {dimension_semantics = [#tpu.dimension_semantics<parallel>], iteration_bounds = array<i64: 1>, scalar_prefetch = 0 : i64, scratch_operands = 0 : i64, tpu.core_type = #tpu.core_type<tc>, window_params = [{transform_indices = @transform_0, window_bounds = array<i64: 8, 128>}, {transform_indices = @transform_1, window_bounds = array<i64: 8, 128>}, {transform_indices = @transform_2, window_bounds = array<i64: 8, 1>}, {transform_indices = @transform_3, window_bounds = array<i64: 1, 8, 128>}]} {
    %c0 = arith.constant 0 : index
    %c0_0 = arith.constant 0 : index
    %0 = vector.load %arg1[%c0, %c0_0] : memref<8x128xf32, #tpu.memory_space<vmem>>, vector<8x128xf32>
    %c0_1 = arith.constant 0 : index
    %c0_2 = arith.constant 0 : index
    %1 = vector.load %arg2[%c0_1, %c0_2] : memref<8x128xf32, #tpu.memory_space<vmem>>, vector<8x128xf32>
    %c0_3 = arith.constant 0 : index
    %c0_4 = arith.constant 0 : index
    %2 = vector.load %arg3[%c0_3, %c0_4] : memref<8x1xi32, #tpu.memory_space<vmem>>, vector<8x1xi32>
    %3 = tpu.iota {dimensions = array<i32: 1>} : vector<1x128xi32>
    %c16_i32 = arith.constant 16 : i32
    %4 = vector.broadcast %c16_i32 : i32 to vector<1x128xi32>
    %5 = arith.cmpi slt, %3, %4 : vector<1x128xi32>
    %cst = arith.constant -1.000000e+30 : f32
    %6 = vector.shape_cast %5 : vector<1x128xi1> to vector<1x128xi1>
    %7 = vector.broadcast %6 : vector<1x128xi1> to vector<8x128xi1>
    %8 = vector.broadcast %cst : f32 to vector<8x128xf32>
    %9 = arith.select %7, %0, %8 : vector<8x128xi1>, vector<8x128xf32>
    %cst_5 = arith.constant -1.000000e+30 : f32
    %10 = vector.shape_cast %5 : vector<1x128xi1> to vector<1x128xi1>
    %11 = vector.broadcast %10 : vector<1x128xi1> to vector<8x128xi1>
    %12 = vector.broadcast %cst_5 : f32 to vector<8x128xf32>
    %13 = arith.select %11, %1, %12 : vector<8x128xi1>, vector<8x128xf32>
    %cst_6 = arith.constant dense<0xFF800000> : vector<8xf32>
    %14 = vector.multi_reduction <maximumf>, %9, %cst_6 [1] : vector<8x128xf32> to vector<8xf32>
    %15 = vector.shape_cast %14 : vector<8xf32> to vector<8x1xf32>
    %16 = vector.broadcast %15 : vector<8x1xf32> to vector<8x128xf32>
    %17 = arith.subf %9, %16 : vector<8x128xf32>
    %cst_7 = arith.constant dense<0xFF800000> : vector<8xf32>
    %18 = vector.multi_reduction <maximumf>, %13, %cst_7 [1] : vector<8x128xf32> to vector<8xf32>
    %19 = vector.shape_cast %18 : vector<8xf32> to vector<8x1xf32>
    %20 = vector.broadcast %19 : vector<8x1xf32> to vector<8x128xf32>
    %21 = arith.subf %13, %20 : vector<8x128xf32>
    %22 = math.exp %21 : vector<8x128xf32>
    %23 = math.exp %17 : vector<8x128xf32>
    %cst_8 = arith.constant dense<0.000000e+00> : vector<8xf32>
    %24 = vector.multi_reduction <add>, %23, %cst_8 [1] : vector<8x128xf32> to vector<8xf32>
    %25 = vector.shape_cast %24 : vector<8xf32> to vector<8x1xf32>
    %cst_9 = arith.constant dense<0.000000e+00> : vector<8xf32>
    %26 = vector.multi_reduction <add>, %22, %cst_9 [1] : vector<8x128xf32> to vector<8xf32>
    %27 = vector.shape_cast %26 : vector<8xf32> to vector<8x1xf32>
    %28 = math.log %25 : vector<8x1xf32>
    %29 = math.log %27 : vector<8x1xf32>
    %30 = arith.subf %21, %17 : vector<8x128xf32>
    %31 = arith.mulf %22, %30 : vector<8x128xf32>
    %cst_10 = arith.constant dense<0.000000e+00> : vector<8xf32>
    %32 = vector.multi_reduction <add>, %31, %cst_10 [1] : vector<8x128xf32> to vector<8xf32>
    %33 = vector.shape_cast %32 : vector<8xf32> to vector<8x1xf32>
    %34 = arith.divf %33, %27 : vector<8x1xf32>
    %35 = arith.subf %28, %29 : vector<8x1xf32>
    %36 = arith.addf %34, %35 : vector<8x1xf32>
    %37 = vector.broadcast %3 : vector<1x128xi32> to vector<8x128xi32>
    %38 = vector.broadcast %2 : vector<8x1xi32> to vector<8x128xi32>
    %39 = arith.cmpi eq, %37, %38 : vector<8x128xi32>
    %cst_11 = arith.constant 0.000000e+00 : f32
    %40 = vector.broadcast %cst_11 : f32 to vector<8x128xf32>
    %41 = arith.select %39, %17, %40 : vector<8x128xi1>, vector<8x128xf32>
    %cst_12 = arith.constant dense<0.000000e+00> : vector<8xf32>
    %42 = vector.multi_reduction <add>, %41, %cst_12 [1] : vector<8x128xf32> to vector<8xf32>
    %43 = vector.shape_cast %42 : vector<8xf32> to vector<8x1xf32>
    %44 = arith.subf %28, %43 : vector<8x1xf32>
    %45 = vector.shape_cast %36 : vector<8x1xf32> to vector<1x8x1xf32>
    %cst_13 = arith.constant dense<0.000000e+00> : vector<1xf32>
    %46 = vector.multi_reduction <add>, %45, %cst_13 [1, 2] : vector<1x8x1xf32> to vector<1xf32>
    %47 = vector.shape_cast %46 : vector<1xf32> to vector<1x1x1xf32>
    %48 = vector.extract %47[0, 0, 0] : f32 from vector<1x1x1xf32>
    %49 = vector.shape_cast %44 : vector<8x1xf32> to vector<1x8x1xf32>
    %cst_14 = arith.constant dense<0.000000e+00> : vector<1xf32>
    %50 = vector.multi_reduction <add>, %49, %cst_14 [1, 2] : vector<1x8x1xf32> to vector<1xf32>
    %51 = vector.shape_cast %50 : vector<1xf32> to vector<1x1x1xf32>
    %52 = vector.extract %51[0, 0, 0] : f32 from vector<1x1x1xf32>
    %53 = tpu.iota {dimensions = array<i32: 2>} : vector<1x8x128xi32>
    %c0_i32 = arith.constant 0 : i32
    %54 = vector.broadcast %c0_i32 : i32 to vector<1x8x128xi32>
    %55 = arith.cmpi eq, %53, %54 : vector<1x8x128xi32>
    %c1_i32 = arith.constant 1 : i32
    %56 = vector.broadcast %c1_i32 : i32 to vector<1x8x128xi32>
    %57 = arith.cmpi eq, %53, %56 : vector<1x8x128xi32>
    %cst_15 = arith.constant 0.000000e+00 : f32
    %58 = vector.broadcast %52 : f32 to vector<1x8x128xf32>
    %59 = vector.broadcast %cst_15 : f32 to vector<1x8x128xf32>
    %60 = arith.select %57, %58, %59 : vector<1x8x128xi1>, vector<1x8x128xf32>
    %61 = vector.broadcast %48 : f32 to vector<1x8x128xf32>
    %62 = arith.select %55, %61, %60 : vector<1x8x128xi1>, vector<1x8x128xf32>
    %c0_16 = arith.constant 0 : index
    %c0_17 = arith.constant 0 : index
    %c0_18 = arith.constant 0 : index
    %63 = vector.load %arg4[%c0_16, %c0_17, %c0_18] : memref<1x8x128xf32, #tpu.memory_space<vmem>>, vector<1x8x128xf32>
    tpu.vector_store %arg4[%c0_16, %c0_17, %c0_18], %62 {strides = array<i32>} : memref<1x8x128xf32, #tpu.memory_space<vmem>>, vector<1x8x128xf32>,
    return
  }
  func.func @transform_0(%arg0: i32) -> (i32, i32) {
    %c0_i32 = arith.constant 0 : i32
    %c0_i32_0 = arith.constant 0 : i32
    return %arg0, %c0_i32 : i32, i32
  }
  func.func @transform_1(%arg0: i32) -> (i32, i32) {
    %c0_i32 = arith.constant 0 : i32
    %c0_i32_0 = arith.constant 0 : i32
    return %arg0, %c0_i32 : i32, i32
  }
  func.func @transform_2(%arg0: i32) -> (i32, i32) {
    %c0_i32 = arith.constant 0 : i32
    %c0_i32_0 = arith.constant 0 : i32
    return %arg0, %c0_i32 : i32, i32
  }
  func.func @transform_3(%arg0: i32) -> (i32, i32, i32) {
    %c0_i32 = arith.constant 0 : i32
    %c0_i32_0 = arith.constant 0 : i32
    %c0_i32_1 = arith.constant 0 : i32
    return %arg0, %c0_i32, %c0_i32_0 : i32, i32, i32
  }
}

</mosaic_0001>

<llo_original>
// kernel: tpu_custom_call.1
$region0: #{tpu_custom_call.1}
  #allocation0 [shape = 'u32[]', space=smem, size = 0x4, offset = 0x4, fixed_abs, tag = 'smem constant byte address 0x4 - core index']
  #allocation1 [shape = 'u32[72,128]{1,0:T(1,128)}', space=vmem, size = 0x9000, scoped, tag = 'internal scratch']
  %s0 = inlined_call_operand.vmem [shape: f32[8,16], index: 0, kind: input, shape index: {}]
  %s1 = inlined_call_operand.hbm [shape: f32[8,16], index: 1, kind: input, shape index: {}]
  %s2 = inlined_call_operand.vmem [shape: s32[8,1], index: 2, kind: input, shape index: {}]
  %s3 = inlined_call_operand.hbm [shape: f32[1,8,128], index: 3, kind: output, shape index: {}]
  %s4 = sld [smem:[#allocation0]]
  $region26: #{tpu_custom_call.1} parent=0
    _
  %s6 = ssub.s32 1, %s4
  %s7 = scalar_select 0, %s6, %s4
  $region1: #{tpu_custom_call.1} parent=0
    #allocation2 [shape = 'u8[4096]{0}', space=vmem, size = 0x1000, scoped, tag = 'input window, operand 1, single buffered']
    #allocation3 [shape = 's32[1]{0}', space=sflag, size = 0x4, scoped, tag = 'scoped memory for tpu_custom_call.1']
    #allocation4 [shape = 's32[1]{0}', space=sflag, size = 0x4, scoped, tag = 'scoped memory for tpu_custom_call.1']
    #allocation5 [shape = 'u8[4096]{0}', space=vmem, size = 0x1000, scoped, tag = 'output window, operand 0, single buffered']
    %8 = vsyncpa [#allocation3], 0
    %9 = vsyncpa [#allocation4], 0
    // Predicated region
    $region2: #{tpu_custom_call.1} parent=1 // pred_check
      _
    $region3: #{tpu_custom_call.1} parent=1 // pred_check_branch
      %11 = sbr.rel (0) target = $region5
    $region4: #{tpu_custom_call.1} parent=1 // pred_region
      _
    $region5: #{tpu_custom_call.1} parent=1 // pred_fallthru
      _
    // Predicated region
    $region6: #{tpu_custom_call.1} parent=1 // pred_check
      _
    $region7: #{tpu_custom_call.1} parent=1 // pred_check_branch
      %13 = sbr.rel (0) target = $region9
    $region8: #{tpu_custom_call.1} parent=1 // pred_region
      %15 = vsyncadd [#allocation3], 0
      %s17 = sshll.u32 %s1, 4
      %s18 = int_to_ptr.hbm [resolvable:$true] %s17
      %s19 = sshll.u32 [#allocation2], 4
      %s20 = int_to_ptr.vmem [resolvable:$true] %s19
      %22 = dma.hbm_to_vmem [thread:$0]  %s18, 128, %s20, [#allocation3]
    $region9: #{tpu_custom_call.1} parent=1 // pred_fallthru
      _
    // Predicated region
    $region10: #{tpu_custom_call.1} parent=1 // pred_check
      _
    $region11: #{tpu_custom_call.1} parent=1 // pred_check_branch
      %24 = sbr.rel (0) target = $region13
    $region12: #{tpu_custom_call.1} parent=1 // pred_region
      _
    $region13: #{tpu_custom_call.1} parent=1 // pred_fallthru
      _
    // Predicated region
    $region14: #{tpu_custom_call.1} parent=1 // pred_check
      _
    $region15: #{tpu_custom_call.1} parent=1 // pred_check_branch
      %26 = sbr.rel (0) target = $region17
    $region16: #{tpu_custom_call.1} parent=1 // pred_region
      %28 = dma.done [#allocation3], 128
    $region17: #{tpu_custom_call.1} parent=1 // pred_fallthru
      _
    %v29 = vld [vmem:[%s0] sm:$0xff]
    %v30 = vld [vmem:[#allocation2] sm:$0xff]
    %v31 = vld [vmem:[%s2] sm:$0xff]
    %v32 = vlaneseq
    %v33 = vand.u32 %v32, 127
    %vm34 = vcmp.lt.s32.totalorder %v33, 16
    %v35 = vsel %vm34, 1, 0
    %vm36 = vcmp.eq.s32.totalorder %v35, 1
    %v37 = vsel %vm36, %v29, -1e+30
    %v38 = vsel %vm36, %v30, -1e+30
    %39 = vmax.xlane.f32.xlu0 %v37
    %v40 = vpop.xlane.xlu0 %39
    %v41 = vsub.f32 %v37, %v40
    %42 = vmax.xlane.f32.xlu0 %v38
    %v43 = vpop.xlane.xlu0 %42
    %v44 = vsub.f32 %v38, %v43
    %v45 = vmul.f32 %v44, 1.442695
    %v46 = vpow.pop %v45
    %v47 = vmul.f32 %v41, 1.442695
    %v48 = vpow.pop %v47
    %49 = vadd.xlane.f32.xlu0 %v48
    %v50 = vpop.xlane.xlu0 %49
    %51 = vadd.xlane.f32.xlu0 %v46
    %v52 = vpop.xlane.xlu0 %51
    %v53 = vlog2.pop %v50
    %v54 = vmul.f32 %v53, 0.6931472
    %v55 = vlog2.pop %v52
    %v56 = vmul.f32 %v55, 0.6931472
    %v57 = vsub.f32 %v44, %v41
    %v58 = vmul.f32 %v46, %v57
    %59 = vadd.xlane.f32.xlu0 %v58
    %v60 = vpop.xlane.xlu0 %59
    %v61 = vrcp.pop %v52
    %v62 = vmul.f32 %v52, %v61
    %v63 = vsub.f32 1.0, %v62
    %v64 = vmul.f32 %v61, %v63
    %v65 = vadd.f32 %v61, %v64
    %vm66 = vweird.f32 %v52
    %vm67 = vweird.f32 %v61
    %vm68 = vmor %vm66, %vm67
    %v69 = vsel %vm68, %v61, %v65
    %v70 = vand.u32 2147483647, %v52
    %vm71 = vcmp.eq.f32.partialorder %v70, 8.507059e+37
    %v72 = vand.u32 %v52, 2147483648
    %v73 = vor.u32 1.1754944e-38, %v72
    %v74 = vsel %vm71, %v73, %v69
    %v75 = vmul.f32 %v60, %v74
    %v76 = vsub.f32 %v54, %v56
    %v77 = vadd.f32 %v75, %v76
    %78 = vset.pattern.permute.xlu0 0
    %79 = vperm.xlu0 %78, %v31
    %v80 = vpop.permute.xlu0 %79
    %vm81 = vcmp.eq.s32.totalorder %v33, %v80
    %v82 = vsel %vm81, %v41, 0.0
    %83 = vadd.xlane.f32.xlu0 %v82
    %v84 = vpop.xlane.xlu0 %83
    %v85 = vsub.f32 %v54, %v84
    %vm86 = vcmask 7168
    %v87 = vsel %vm86, %v77, 0.0
    %88 = vadd.xlane.f32.xlu0 %v87
    %v89 = vpop.xlane.xlu0 %88
    %v90 = vrot.slane %v89, 4
    %v91 = vadd.f32 %v89, %v90
    %v92 = vrot.slane %v91, 2
    %v93 = vadd.f32 %v91, %v92
    %v94 = vrot.slane %v93, 1
    %v95 = vadd.f32 %v93, %v94
    %s96 = vtos %v95
    %v97 = vsel %vm86, %v85, 0.0
    %98 = vadd.xlane.f32.xlu0 %v97
    %v99 = vpop.xlane.xlu0 %98
    %v100 = vrot.slane %v99, 4
    %v101 = vadd.f32 %v99, %v100
    %v102 = vrot.slane %v101, 2
    %v103 = vadd.f32 %v101, %v102
    %v104 = vrot.slane %v103, 1
    %v105 = vadd.f32 %v103, %v104
    %s106 = vtos %v105
    %vm107 = vcmp.eq.s32.totalorder %v33, 0
    %vm108 = vcmp.eq.s32.totalorder %v33, 1
    %v109 = vstv %s106
    %v110 = vsel %vm108, %v109, 0.0
    %v111 = vstv %s96
    %v112 = vsel %vm107, %v111, %v110
    %113 = vst [vmem:[#allocation5] sm:$0xff] %v112
    // Predicated region
    $region18: #{tpu_custom_call.1} parent=1 // pred_check
      _
    $region19: #{tpu_custom_call.1} parent=1 // pred_check_branch
      %115 = sbr.rel (0) target = $region21
    $region20: #{tpu_custom_call.1} parent=1 // pred_region
      %117 = vsyncadd [#allocation4], 0
      %s119 = sshll.u32 [#allocation5], 4
      %s120 = int_to_ptr.vmem [resolvable:$true] %s119
      %s121 = sshll.u32 %s3, 4
      %s122 = int_to_ptr.hbm [resolvable:$true] %s121
      %124 = dma.vmem_to_hbm [thread:$0]  %s120, 128, %s122, [#allocation4]
    $region21: #{tpu_custom_call.1} parent=1 // pred_fallthru
      _
    // Predicated region
    $region22: #{tpu_custom_call.1} parent=1 // pred_check
      _
    $region23: #{tpu_custom_call.1} parent=1 // pred_check_branch
      %126 = sbr.rel (0) target = $region25
    $region24: #{tpu_custom_call.1} parent=1 // pred_region
      %128 = dma.done [#allocation4], 128
    $region25: #{tpu_custom_call.1} parent=1 // pred_fallthru
      _
    %129 = vsyncpa [#allocation3], 1
    %130 = vsyncpa [#allocation4], 1

</llo_original>
